<compile_context>
chip_gen: v7x
topology: tpu7x:2x2x1
jax: 0.10.0
libtpu: 0.0.40
codegen_flags: <defaults>
</compile_context>

<pallas_src>
import functools
import math

import jax
import jax.numpy as jnp
from jax.experimental import pallas as pl
from jax.experimental.pallas import tpu as pltpu


def _round_up(x: int, n: int) -> int:
    return ((x + n - 1) // n) * n


# ----------------------------------------------------------------------------
# Stage 1: B-only pre-pass (norms, target logit, margin math, EMA update).
# ----------------------------------------------------------------------------
def make_prepass_kernel(m: float, b_true: int):
    cos_m = math.cos(m)
    sin_m = math.sin(m)
    threshold = math.cos(math.pi - m)
    mm = math.sin(math.pi - m) * m

    def kernel(emb_ref, wl_ref, t_ref, emb_n_ref, ctm_ref, ftl_ref, t_out_ref):
        emb = emb_ref[...]          # (B, D) raw embeddings (f32)
        wl = wl_ref[...]            # (B, D) gathered target kernel columns (transposed)
        t_old = t_ref[0, 0]         # scalar f32 (SMEM)

        # l2_norm(embeddings, axis=1) / l2_norm(kernel[:, label], axis=0)
        # multiply-by-rsqrt (EUP) instead of divide-by-sqrt.
        emb_n = emb * jax.lax.rsqrt(jnp.sum(emb * emb, axis=1, keepdims=True))
        wl_n = wl * jax.lax.rsqrt(jnp.sum(wl * wl, axis=1, keepdims=True))

        # target_logit = clamp(<emb_n_i, w_n[:, label_i]>, -1, 1)
        tl = jnp.clip(jnp.sum(emb_n * wl_n, axis=1, keepdims=True), -1.0, 1.0)

        sin_theta = jnp.sqrt(1.0 - tl * tl)
        ctm = tl * cos_m - sin_theta * sin_m                      # cos(theta + m)
        ftl = jnp.where(tl > threshold, ctm, tl - mm)             # final target logit

        # EMA buffer update: mean over the TRUE batch rows (ignore padding).
        tl_valid = tl[:b_true, :]
        t_new = (jnp.sum(tl_valid) / float(b_true)) * 0.01 + (1.0 - 0.01) * t_old

        # Stored in the matmul dtype (bf16 when the bf16-weight stream is used)
        # so the hot loop never re-casts the resident (B, D) operand.
        emb_n_ref[...] = emb_n.astype(emb_n_ref.dtype)
        ctm_ref[...] = ctm
        ftl_ref[...] = ftl
        t_out_ref[0, 0] = t_new

    return kernel


# ----------------------------------------------------------------------------
# Stage 2: main kernel, tiled over the class dimension C.
# ----------------------------------------------------------------------------
def make_main_kernel(s: float, compute_origin: bool):
    def kernel(emb_ref, w_ref, icn_ref, ctm_ref, ftl_ref, label_ref, t_ref,
               *out_refs):
        out_ref = out_refs[0]

        emb_n = emb_ref[...]          # (B, D) pre-normalized embeddings (resident)
        w = w_ref[...]                # (D, TILE_C) UN-normalized weight tile
        inv_cn = icn_ref[...]         # (1, TILE_C) f32 precomputed 1/||w_col||
        cos_theta_m = ctm_ref[...]    # (B, 1)
        ftl = ftl_ref[...]            # (B, 1)
        label = label_ref[...]        # (B, 1) int32
        t_new = t_ref[0, 0]           # scalar f32 (SMEM)

        # Column normalization is applied AFTER the MXU matmul via the
        # precomputed per-column inverse norm (hoisted out of the hot loop).
        # NOTE: padded lanes of the last tile may carry garbage inv_cn values;
        # they stay lane-isolated and are dropped by the masked output store.
        cos_theta = jnp.dot(emb_n, w, preferred_element_type=jnp.float32) * inv_cn
        cos_theta = jnp.clip(cos_theta, -1.0, 1.0)

        b, tc = cos_theta.shape
        col0 = pl.program_id(0) * tc
        col_ids = col0 + jax.lax.broadcasted_iota(jnp.int32, (b, tc), 1)
        is_target = col_ids == label                      # (B, TILE_C)

        # cos_theta[mask] = hard_example * (t + hard_example)
        hard = jnp.where(cos_theta > cos_theta_m,
                         cos_theta * (t_new + cos_theta), cos_theta)
        # scatter_(1, label, final_target_logit) overrides the label column.
        final = jnp.where(is_target, ftl, hard)

        out_ref[...] = (final * s).astype(out_ref.dtype)
        if compute_origin:
            out_refs[1][...] = (cos_theta * s).astype(out_refs[1].dtype)

    return kernel


# ----------------------------------------------------------------------------
# Tiling helpers.
# ----------------------------------------------------------------------------
def _vmem_capacity_bytes() -> int:
    try:
        return int(pltpu.get_tpu_info().vmem_capacity_bytes)
    except Exception:
        return 64 * 1024 * 1024   # conservative fallback (v7x per-TC VMEM)


def _pick_tile_c(b: int, d: int, c: int, vmem_cap: int,
                 w_itemsize: int, n_outputs: int) -> int:
    """Largest 128-aligned C tile whose double-buffered footprint fits VMEM.

    budget = 0.4*cap (half of the 0.8*cap vmem_limit; headroom for scratch).
    Double-buffered per-column bytes: W tile + output tile(s) + inv_colnorm.
    """
    budget = int(vmem_cap * 0.4)
    fixed = 4 * b * d + 4 * 8 * b                      # resident (B,D)/(B,1) operands
    per_col = 2 * (d * w_itemsize + n_outputs * b * 4 + 4)
    tc = max(128, ((budget - fixed) // per_col // 128) * 128)
    tc = min(tc, 4096)                                 # raised cap (v5e/v6e 128 MiB VMEM)
    if tc >= c:
        return c                                       # single grid step
    steps = -(-c // tc)
    # 2-TensorCore (v7x) load balance: keep short grids even instead of
    # maximizing tile size (a 3- or 5-step 'parallel' grid leaves ~20% idle).
    if 1 < steps < 8 and steps % 2 == 1:
        tc_even = _round_up(-(-c // (steps + 1)), 128)
        if tc_even >= 256:
            tc = tc_even
    return int(tc)


# ----------------------------------------------------------------------------
# Wrapper.
# ----------------------------------------------------------------------------
@functools.partial(jax.jit,
                   static_argnames=("m", "s", "use_bf16_weights",
                                    "compute_origin", "tile_c"))
def curriculum_face_forward(embeddings, kernel_w, label, t, m=0.5, s=64.0,
                            use_bf16_weights=False, compute_origin=True,
                            tile_c=None):
    B, D = embeddings.shape
    D2, C = kernel_w.shape
    assert D == D2

    # Pad batch to the f32 sublane multiple (8) so all stores stay unmasked.
    B_pad = max(8, _round_up(B, 8))
    if B_pad != B:
        pad = B_pad - B
        embeddings = jnp.concatenate(
            [embeddings, jnp.ones((pad, D), embeddings.dtype)], axis=0)
        label = jnp.concatenate(
            [label, jnp.zeros((pad,), label.dtype)], axis=0)

    embeddings = embeddings.astype(jnp.float32)
    kernel_f32 = kernel_w.astype(jnp.float32)
    label2d = label.reshape(B_pad, 1).astype(jnp.int32)
    t2d = jnp.asarray(t, jnp.float32).reshape(1, 1)

    # Per-column inverse L2 norm, computed ONCE (hoisted out of the hot loop,
    # and the prerequisite for streaming W as bf16 with f32-accurate norms).
    inv_colnorm = 1.0 / jnp.sqrt(
        jnp.sum(kernel_f32 * kernel_f32, axis=0, keepdims=True))     # (1, C) f32

    # Data-dependent gather of the label columns (O(B*D)); done with XLA since
    # an arbitrary gather does not map onto a BlockSpec index_map.
    # TODO(synk): if the caller can provide the class matrix as (C, D)
    # row-major, gather contiguous rows here instead (far better HBM burst
    # locality when C is in the 100k+ range).
    w_label = jnp.take(kernel_f32, label2d[:, 0], axis=1).T          # (B_pad, D)

    matmul_dtype = jnp.bfloat16 if use_bf16_weights else jnp.float32
    # bf16 weight stream: cast/store ONCE in HBM so the C-tiled hot loop reads
    # half the bytes of the dominant W stream; XLA fuses the cast with the
    # inv_colnorm reduction read above.  f32-accurate norms are kept via
    # inv_colnorm, so only the matmul operands are bf16.
    w_stream = kernel_f32.astype(matmul_dtype) if use_bf16_weights else kernel_f32

    vmem_cap = _vmem_capacity_bytes()

    # ---- stage 1: B-only pre-pass ------------------------------------------
    emb_n, ctm, ftl, t_new = pl.pallas_call(
        make_prepass_kernel(m, B),
        out_shape=(
            jax.ShapeDtypeStruct((B_pad, D), matmul_dtype),
            jax.ShapeDtypeStruct((B_pad, 1), jnp.float32),
            jax.ShapeDtypeStruct((B_pad, 1), jnp.float32),
            jax.ShapeDtypeStruct((1, 1), jnp.float32),
        ),
        in_specs=[
            pl.BlockSpec(memory_space=pltpu.MemorySpace.VMEM),   # embeddings
            pl.BlockSpec(memory_space=pltpu.MemorySpace.VMEM),   # gathered columns
            pl.BlockSpec(memory_space=pltpu.MemorySpace.SMEM),   # t (1,1)
        ],
        out_specs=(
            pl.BlockSpec(memory_space=pltpu.MemorySpace.VMEM),   # emb_n
            pl.BlockSpec(memory_space=pltpu.MemorySpace.VMEM),   # cos_theta_m
            pl.BlockSpec(memory_space=pltpu.MemorySpace.VMEM),   # final_target_logit
            pl.BlockSpec(memory_space=pltpu.MemorySpace.SMEM),   # t_new (1,1)
        ),
        compiler_params=pltpu.CompilerParams(
            vmem_limit_bytes=int(vmem_cap * 0.8)),
    )(embeddings, w_label, t2d)
    # TODO(synk): tile the pre-pass over B if B*D residents ever approach the
    # VMEM limit (e.g. B=4096, D=1024).

    # ---- stage 2: C-tiled main kernel ---------------------------------------
    n_outputs = 2 if compute_origin else 1
    if tile_c is None:
        tile_c = _pick_tile_c(B_pad, D, C, vmem_cap,
                              jnp.dtype(matmul_dtype).itemsize, n_outputs)
    grid = (pl.cdiv(C, tile_c),)

    out_shapes = [jax.ShapeDtypeStruct((B_pad, C), jnp.float32)]
    out_specs = [pl.BlockSpec((B_pad, tile_c), lambda j: (0, j))]
    if compute_origin:
        out_shapes.append(jax.ShapeDtypeStruct((B_pad, C), jnp.float32))
        out_specs.append(pl.BlockSpec((B_pad, tile_c), lambda j: (0, j)))

    w_bytes = jnp.dtype(matmul_dtype).itemsize

    results = pl.pallas_call(
        make_main_kernel(s, compute_origin),
        out_shape=tuple(out_shapes),
        grid=grid,
        in_specs=[
            pl.BlockSpec((B_pad, D), lambda j: (0, 0)),          # emb_n (resident)
            # On v7x (per-step DMA ~2-3us at 3.2 TB/s) pipeline_mode=
            # pl.Buffered(3) on this spec + out_specs hides per-step latency;
            # left at the default depth of 2 here.
            pl.BlockSpec((D, tile_c), lambda j: (0, j)),         # weight tile
            pl.BlockSpec((1, tile_c), lambda j: (0, j)),         # inv col norm tile
            pl.BlockSpec((B_pad, 1), lambda j: (0, 0)),          # cos_theta_m
            pl.BlockSpec((B_pad, 1), lambda j: (0, 0)),          # final_target_logit
            pl.BlockSpec((B_pad, 1), lambda j: (0, 0)),          # label
            pl.BlockSpec((1, 1), lambda j: (0, 0),
                         memory_space=pltpu.MemorySpace.SMEM),   # t_new scalar
        ],
        out_specs=tuple(out_specs),
        compiler_params=pltpu.CompilerParams(
            dimension_semantics=("parallel",),
            vmem_limit_bytes=int(vmem_cap * 0.8),
        ),
        cost_estimate=pl.CostEstimate(
            flops=2 * B_pad * D * C,
            transcendentals=0,
            bytes_accessed=(w_bytes * D * C + w_bytes * B_pad * D
                            + 4 * n_outputs * B_pad * C + 4 * C),
        ),
    )(emb_n, w_stream, inv_colnorm, ctm, ftl, label2d, t_new)

    if not isinstance(results, (tuple, list)):
        results = (results,)
    out = results[0][:B]
    origin = results[1][:B] if compute_origin else None
    return out, origin, t_new.reshape(())


# ----------------------------------------------------------------------------
# Pure-JAX reference mirroring the PyTorch module exactly.
# ----------------------------------------------------------------------------
def reference_forward(emb, w, label, t, m=0.5, s=64.0):
    cos_m = math.cos(m)
    sin_m = math.sin(m)
    threshold = math.cos(math.pi - m)
    mm = math.sin(math.pi - m) * m
    emb_n = emb / jnp.sqrt(jnp.sum(emb * emb, axis=1, keepdims=True))
    w_n = w / jnp.sqrt(jnp.sum(w * w, axis=0, keepdims=True))
    cos = jnp.clip(emb_n @ w_n, -1.0, 1.0)
    origin = cos
    B, C = cos.shape
    tl = cos[jnp.arange(B), label][:, None]
    st = jnp.sqrt(1.0 - tl * tl)
    ctm = tl * cos_m - st * sin_m
    mask = cos > ctm
    ftl = jnp.where(tl > threshold, ctm, tl - mm)
    t_new = jnp.mean(tl) * 0.01 + (1.0 - 0.01) * t
    cos2 = jnp.where(mask, cos * (t_new + cos), cos)
    onehot = jnp.arange(C)[None, :] == label[:, None]
    cos2 = jnp.where(onehot, ftl, cos2)
    return cos2 * s, origin * s, t_new


if __name__ == "__main__":
    # Small, module-consistent shapes: batch=8, in_features=32, out_features=128
    B, IN_F, OUT_F = 8, 32, 128
    key = jax.random.PRNGKey(0)
    k_emb, k_w, k_lab = jax.random.split(key, 3)

    embeddings = jax.random.normal(k_emb, (B, IN_F), dtype=jnp.float32)
    # nn.init.normal_(self.kernel, std=0.01)
    kernel_w = 0.01 * jax.random.normal(k_w, (IN_F, OUT_F), dtype=jnp.float32)
    label = jax.random.randint(k_lab, (B,), 0, OUT_F, dtype=jnp.int32)
    t_buf = jnp.zeros((), dtype=jnp.float32)    # register_buffer('t', zeros(1))

    out, origin, t_new = curriculum_face_forward(embeddings, kernel_w, label, t_buf)
    jax.block_until_ready((out, origin, t_new))

    ref_out, ref_origin, ref_t = reference_forward(embeddings, kernel_w, label, t_buf)
    assert jnp.allclose(out, ref_out, rtol=1e-5, atol=1e-5), "output mismatch"
    assert jnp.allclose(origin, ref_origin, rtol=1e-5, atol=1e-5), "origin_cos mismatch"
    assert jnp.allclose(t_new, ref_t, rtol=1e-5, atol=1e-6), "t buffer mismatch"

    # Second case: non-multiple-of-8 batch and non-128 class count exercises the
    # batch padding path and the true-B mean for the EMA buffer.
    B2, C2 = 6, 96
    k_e2, k_w2, k_l2 = jax.random.split(jax.random.PRNGKey(1), 3)
    emb2 = jax.random.normal(k_e2, (B2, IN_F), dtype=jnp.float32)
    w2 = 0.01 * jax.random.normal(k_w2, (IN_F, C2), dtype=jnp.float32)
    lab2 = jax.random.randint(k_l2, (B2,), 0, C2, dtype=jnp.int32)
    t2 = jnp.asarray(0.1, dtype=jnp.float32)

    out2, origin2, t_new2 = curriculum_face_forward(emb2, w2, lab2, t2)
    jax.block_until_ready((out2, origin2, t_new2))
    r_out2, r_origin2, r_t2 = reference_forward(emb2, w2, lab2, t2)
    assert jnp.allclose(out2, r_out2, rtol=1e-5, atol=1e-5), "padded output mismatch"
    assert jnp.allclose(origin2, r_origin2, rtol=1e-5, atol=1e-5), "padded origin mismatch"
    assert jnp.allclose(t_new2, r_t2, rtol=1e-5, atol=1e-6), "padded t mismatch"

    # bf16-weight-stream path: looser numerics by design (hard-example mask can
    # flip near its threshold, so only smooth quantities are compared tightly).
    out_bf, origin_bf, t_bf = curriculum_face_forward(
        embeddings, kernel_w, label, t_buf, use_bf16_weights=True)
    jax.block_until_ready((out_bf, origin_bf, t_bf))
    assert bool(jnp.isfinite(out_bf).all()), "bf16 output not finite"
    assert jnp.allclose(origin_bf, ref_origin, rtol=0.05, atol=2.0), "bf16 origin mismatch"
    assert float(jnp.mean(jnp.abs(out_bf - ref_out))) < 2.0, "bf16 output too far"
    assert jnp.allclose(t_bf, ref_t, rtol=1e-5, atol=1e-6), "bf16 t mismatch"

    # origin-less path (halves output HBM traffic for callers that only need logits).
    out_no, origin_no, t_no = curriculum_face_forward(
        embeddings, kernel_w, label, t_buf, compute_origin=False)
    jax.block_until_ready((out_no, t_no))
    assert origin_no is None
    assert jnp.allclose(out_no, ref_out, rtol=1e-5, atol=1e-5), "no-origin output mismatch"

    print("KERNEL_OK")
</pallas_src>

<mosaic_0001>
module attributes {stable_mosaic.version = 11 : i64} {
  func.func @kernel(%arg0: memref<8x32xf32, #tpu.memory_space<vmem>>, %arg1: memref<8x32xf32, #tpu.memory_space<vmem>>, %arg2: memref<1x1xf32, #tpu.memory_space<smem>>, %arg3: memref<8x32xf32, #tpu.memory_space<vmem>>, %arg4: memref<8x1xf32, #tpu.memory_space<vmem>>, %arg5: memref<8x1xf32, #tpu.memory_space<vmem>>, %arg6: memref<1x1xf32, #tpu.memory_space<smem>>) attributes {dimension_semantics = [], scalar_prefetch = 0 : i64, scratch_operands = 0 : i64, tpu.core_type = #tpu.core_type<tc>} {
    %c0 = arith.constant 0 : index
    %c0_0 = arith.constant 0 : index
    %0 = vector.load %arg0[%c0, %c0_0] : memref<8x32xf32, #tpu.memory_space<vmem>>, vector<8x32xf32>
    %c0_1 = arith.constant 0 : index
    %c0_2 = arith.constant 0 : index
    %1 = vector.load %arg1[%c0_1, %c0_2] : memref<8x32xf32, #tpu.memory_space<vmem>>, vector<8x32xf32>
    %c0_3 = arith.constant 0 : index
    %c0_4 = arith.constant 0 : index
    %2 = memref.load %arg2[%c0_3, %c0_4] : memref<1x1xf32, #tpu.memory_space<smem>>
    %3 = arith.mulf %0, %0 : vector<8x32xf32>
    %cst = arith.constant dense<0.000000e+00> : vector<8xf32>
    %4 = vector.multi_reduction <add>, %3, %cst [1] : vector<8x32xf32> to vector<8xf32>
    %5 = vector.shape_cast %4 : vector<8xf32> to vector<8x1xf32>
    %6 = math.rsqrt %5 : vector<8x1xf32>
    %7 = vector.broadcast %6 : vector<8x1xf32> to vector<8x32xf32>
    %8 = arith.mulf %0, %7 : vector<8x32xf32>
    %9 = arith.mulf %1, %1 : vector<8x32xf32>
    %cst_5 = arith.constant dense<0.000000e+00> : vector<8xf32>
    %10 = vector.multi_reduction <add>, %9, %cst_5 [1] : vector<8x32xf32> to vector<8xf32>
    %11 = vector.shape_cast %10 : vector<8xf32> to vector<8x1xf32>
    %12 = math.rsqrt %11 : vector<8x1xf32>
    %13 = vector.broadcast %12 : vector<8x1xf32> to vector<8x32xf32>
    %14 = arith.mulf %1, %13 : vector<8x32xf32>
    %15 = arith.mulf %8, %14 : vector<8x32xf32>
    %cst_6 = arith.constant dense<0.000000e+00> : vector<8xf32>
    %16 = vector.multi_reduction <add>, %15, %cst_6 [1] : vector<8x32xf32> to vector<8xf32>
    %17 = vector.shape_cast %16 : vector<8xf32> to vector<8x1xf32>
    %cst_7 = arith.constant -1.000000e+00 : f32
    %cst_8 = arith.constant 1.000000e+00 : f32
    %18 = vector.broadcast %cst_7 : f32 to vector<8x1xf32>
    %19 = arith.maximumf %18, %17 : vector<8x1xf32>
    %20 = vector.broadcast %cst_8 : f32 to vector<8x1xf32>
    %21 = arith.minimumf %20, %19 : vector<8x1xf32>
    %22 = arith.mulf %21, %21 : vector<8x1xf32>
    %cst_9 = arith.constant 1.000000e+00 : f32
    %23 = vector.broadcast %cst_9 : f32 to vector<8x1xf32>
    %24 = arith.subf %23, %22 : vector<8x1xf32>
    %25 = math.sqrt %24 : vector<8x1xf32>
    %cst_10 = arith.constant 0.87758255 : f32
    %26 = vector.broadcast %cst_10 : f32 to vector<8x1xf32>
    %27 = arith.mulf %21, %26 : vector<8x1xf32>
    %cst_11 = arith.constant 0.47942555 : f32
    %28 = vector.broadcast %cst_11 : f32 to vector<8x1xf32>
    %29 = arith.mulf %25, %28 : vector<8x1xf32>
    %30 = arith.subf %27, %29 : vector<8x1xf32>
    %cst_12 = arith.constant -0.87758255 : f32
    %31 = vector.broadcast %cst_12 : f32 to vector<8x1xf32>
    %32 = arith.cmpf ogt, %21, %31 : vector<8x1xf32>
    %cst_13 = arith.constant 0.239712775 : f32
    %33 = vector.broadcast %cst_13 : f32 to vector<8x1xf32>
    %34 = arith.subf %21, %33 : vector<8x1xf32>
    %35 = arith.select %32, %30, %34 : vector<8x1xi1>, vector<8x1xf32>
    %36 = vector.shape_cast %21 : vector<8x1xf32> to vector<1x8x1xf32>
    %cst_14 = arith.constant dense<0.000000e+00> : vector<1xf32>
    %37 = vector.multi_reduction <add>, %36, %cst_14 [1, 2] : vector<1x8x1xf32> to vector<1xf32>
    %38 = vector.shape_cast %37 : vector<1xf32> to vector<1x1x1xf32>
    %39 = vector.extract %38[0, 0, 0] : f32 from vector<1x1x1xf32>
    %cst_15 = arith.constant 8.000000e+00 : f32
    %40 = arith.divf %39, %cst_15 : f32
    %cst_16 = arith.constant 0.00999999977 : f32
    %41 = arith.mulf %40, %cst_16 : f32
    %cst_17 = arith.constant 9.900000e-01 : f32
    %42 = arith.mulf %cst_17, %2 : f32
    %43 = arith.addf %41, %42 : f32
    %c0_18 = arith.constant 0 : index
    %c0_19 = arith.constant 0 : index
    %44 = vector.load %arg3[%c0_18, %c0_19] : memref<8x32xf32, #tpu.memory_space<vmem>>, vector<8x32xf32>
    tpu.vector_store %arg3[%c0_18, %c0_19], %8 {strides = array<i32>} : memref<8x32xf32, #tpu.memory_space<vmem>>, vector<8x32xf32>,
    %c0_20 = arith.constant 0 : index
    %c0_21 = arith.constant 0 : index
    %45 = vector.load %arg4[%c0_20, %c0_21] : memref<8x1xf32, #tpu.memory_space<vmem>>, vector<8x1xf32>
    tpu.vector_store %arg4[%c0_20, %c0_21], %30 {strides = array<i32>} : memref<8x1xf32, #tpu.memory_space<vmem>>, vector<8x1xf32>,
    %c0_22 = arith.constant 0 : index
    %c0_23 = arith.constant 0 : index
    %46 = vector.load %arg5[%c0_22, %c0_23] : memref<8x1xf32, #tpu.memory_space<vmem>>, vector<8x1xf32>
    tpu.vector_store %arg5[%c0_22, %c0_23], %35 {strides = array<i32>} : memref<8x1xf32, #tpu.memory_space<vmem>>, vector<8x1xf32>,
    %c0_24 = arith.constant 0 : index
    %c0_25 = arith.constant 0 : index
    %47 = memref.load %arg6[%c0_24, %c0_25] : memref<1x1xf32, #tpu.memory_space<smem>>
    memref.store %43, %arg6[%c0_24, %c0_25] : memref<1x1xf32, #tpu.memory_space<smem>>
    return
  }
}

module attributes {stable_mosaic.version = 11 : i64} {
  func.func @kernel(%arg0: i32, %arg1: memref<8x32xf32, #tpu.memory_space<vmem>>, %arg2: memref<32x128xf32, #tpu.memory_space<vmem>>, %arg3: memref<1x128xf32, #tpu.memory_space<vmem>>, %arg4: memref<8x1xf32, #tpu.memory_space<vmem>>, %arg5: memref<8x1xf32, #tpu.memory_space<vmem>>, %arg6: memref<8x1xi32, #tpu.memory_space<vmem>>, %arg7: memref<1x1xf32, #tpu.memory_space<smem>>, %arg8: memref<8x128xf32, #tpu.memory_space<vmem>>, %arg9: memref<8x128xf32, #tpu.memory_space<vmem>>) attributes {dimension_semantics = [#tpu.dimension_semantics<parallel>], iteration_bounds = array<i64: 1>, scalar_prefetch = 0 : i64, scratch_operands = 0 : i64, tpu.core_type = #tpu.core_type<tc>, window_params = [{pipeline_mode = #tpu.pipeline_mode<synchronous>, transform_indices = @transform_0, window_bounds = array<i64: 8, 32>}, {transform_indices = @transform_1, window_bounds = array<i64: 32, 128>}, {transform_indices = @transform_2, window_bounds = array<i64: 1, 128>}, {pipeline_mode = #tpu.pipeline_mode<synchronous>, transform_indices = @transform_3, window_bounds = array<i64: 8, 1>}, {pipeline_mode = #tpu.pipeline_mode<synchronous>, transform_indices = @transform_4, window_bounds = array<i64: 8, 1>}, {pipeline_mode = #tpu.pipeline_mode<synchronous>, transform_indices = @transform_5, window_bounds = array<i64: 8, 1>}, {transform_indices = @transform_6, window_bounds = array<i64: 1, 1>}, {transform_indices = @transform_7, window_bounds = array<i64: 8, 128>}, {transform_indices = @transform_8, window_bounds = array<i64: 8, 128>}]} {
    %c0 = arith.constant 0 : index
    %c0_0 = arith.constant 0 : index
    %0 = vector.load %arg1[%c0, %c0_0] : memref<8x32xf32, #tpu.memory_space<vmem>>, vector<8x32xf32>
    %c0_1 = arith.constant 0 : index
    %c0_2 = arith.constant 0 : index
    %1 = vector.load %arg2[%c0_1, %c0_2] : memref<32x128xf32, #tpu.memory_space<vmem>>, vector<32x128xf32>
    %c0_3 = arith.constant 0 : index
    %c0_4 = arith.constant 0 : index
    %2 = vector.load %arg3[%c0_3, %c0_4] : memref<1x128xf32, #tpu.memory_space<vmem>>, vector<1x128xf32>
    %c0_5 = arith.constant 0 : index
    %c0_6 = arith.constant 0 : index
    %3 = vector.load %arg4[%c0_5, %c0_6] : memref<8x1xf32, #tpu.memory_space<vmem>>, vector<8x1xf32>
    %c0_7 = arith.constant 0 : index
    %c0_8 = arith.constant 0 : index
    %4 = vector.load %arg5[%c0_7, %c0_8] : memref<8x1xf32, #tpu.memory_space<vmem>>, vector<8x1xf32>
    %c0_9 = arith.constant 0 : index
    %c0_10 = arith.constant 0 : index
    %5 = vector.load %arg6[%c0_9, %c0_10] : memref<8x1xi32, #tpu.memory_space<vmem>>, vector<8x1xi32>
    %c0_11 = arith.constant 0 : index
    %c0_12 = arith.constant 0 : index
    %6 = memref.load %arg7[%c0_11, %c0_12] : memref<1x1xf32, #tpu.memory_space<smem>>
    %cst = arith.constant dense<0.000000e+00> : vector<8x128xf32>
    %7 = tpu.matmul %0, %1, %cst {dimension_numbers = #tpu.dot_dimension_numbers<[1], [0], [0], [1], [0, 0, 1, 1], [], []>} : vector<8x32xf32>, vector<32x128xf32>, vector<8x128xf32> -> vector<8x128xf32>
    %8 = vector.broadcast %2 : vector<1x128xf32> to vector<8x128xf32>
    %9 = arith.mulf %7, %8 : vector<8x128xf32>
    %cst_13 = arith.constant -1.000000e+00 : f32
    %cst_14 = arith.constant 1.000000e+00 : f32
    %10 = vector.broadcast %cst_13 : f32 to vector<8x128xf32>
    %11 = arith.maximumf %10, %9 : vector<8x128xf32>
    %12 = vector.broadcast %cst_14 : f32 to vector<8x128xf32>
    %13 = arith.minimumf %12, %11 : vector<8x128xf32>
    %c128_i32 = arith.constant 128 : i32
    %14 = arith.muli %arg0, %c128_i32 : i32
    %15 = tpu.iota {dimensions = array<i32: 1>} : vector<8x128xi32>
    %16 = vector.broadcast %14 : i32 to vector<8x128xi32>
    %17 = arith.addi %16, %15 : vector<8x128xi32>
    %18 = vector.broadcast %5 : vector<8x1xi32> to vector<8x128xi32>
    %19 = arith.cmpi eq, %17, %18 : vector<8x128xi32>
    %20 = vector.broadcast %3 : vector<8x1xf32> to vector<8x128xf32>
    %21 = arith.cmpf ogt, %13, %20 : vector<8x128xf32>
    %22 = vector.broadcast %6 : f32 to vector<8x128xf32>
    %23 = arith.addf %22, %13 : vector<8x128xf32>
    %24 = arith.mulf %13, %23 : vector<8x128xf32>
    %25 = arith.select %21, %24, %13 : vector<8x128xi1>, vector<8x128xf32>
    %26 = vector.shape_cast %4 : vector<8x1xf32> to vector<8x1xf32>
    %27 = vector.broadcast %26 : vector<8x1xf32> to vector<8x128xf32>
    %28 = arith.select %19, %27, %25 : vector<8x128xi1>, vector<8x128xf32>
    %cst_15 = arith.constant 6.400000e+01 : f32
    %29 = vector.broadcast %cst_15 : f32 to vector<8x128xf32>
    %30 = arith.mulf %28, %29 : vector<8x128xf32>
    %c0_16 = arith.constant 0 : index
    %c0_17 = arith.constant 0 : index
    %31 = vector.load %arg8[%c0_16, %c0_17] : memref<8x128xf32, #tpu.memory_space<vmem>>, vector<8x128xf32>
    tpu.vector_store %arg8[%c0_16, %c0_17], %30 {strides = array<i32>} : memref<8x128xf32, #tpu.memory_space<vmem>>, vector<8x128xf32>,
    %cst_18 = arith.constant 6.400000e+01 : f32
    %32 = vector.broadcast %cst_18 : f32 to vector<8x128xf32>
    %33 = arith.mulf %13, %32 : vector<8x128xf32>
    %c0_19 = arith.constant 0 : index
    %c0_20 = arith.constant 0 : index
    %34 = vector.load %arg9[%c0_19, %c0_20] : memref<8x128xf32, #tpu.memory_space<vmem>>, vector<8x128xf32>
    tpu.vector_store %arg9[%c0_19, %c0_20], %33 {strides = array<i32>} : memref<8x128xf32, #tpu.memory_space<vmem>>, vector<8x128xf32>,
    return
  }
  func.func @transform_0(%arg0: i32) -> (i32, i32) {
    %c0_i32 = arith.constant 0 : i32
    %c0_i32_0 = arith.constant 0 : i32
    %c0_i32_1 = arith.constant 0 : i32
    return %c0_i32, %c0_i32_0 : i32, i32
  }
  func.func @transform_1(%arg0: i32) -> (i32, i32) {
    %c0_i32 = arith.constant 0 : i32
    %c0_i32_0 = arith.constant 0 : i32
    return %c0_i32, %arg0 : i32, i32
  }
  func.func @transform_2(%arg0: i32) -> (i32, i32) {
    %c0_i32 = arith.constant 0 : i32
    %c0_i32_0 = arith.constant 0 : i32
    return %c0_i32, %arg0 : i32, i32
  }
  func.func @transform_3(%arg0: i32) -> (i32, i32) {
    %c0_i32 = arith.constant 0 : i32
    %c0_i32_0 = arith.constant 0 : i32
    %c0_i32_1 = arith.constant 0 : i32
    return %c0_i32, %c0_i32_0 : i32, i32
  }
  func.func @transform_4(%arg0: i32) -> (i32, i32) {
    %c0_i32 = arith.constant 0 : i32
    %c0_i32_0 = arith.constant 0 : i32
    %c0_i32_1 = arith.constant 0 : i32
    return %c0_i32, %c0_i32_0 : i32, i32
  }
  func.func @transform_5(%arg0: i32) -> (i32, i32) {
    %c0_i32 = arith.constant 0 : i32
    %c0_i32_0 = arith.constant 0 : i32
    %c0_i32_1 = arith.constant 0 : i32
    return %c0_i32, %c0_i32_0 : i32, i32
  }
  func.func @transform_6(%arg0: i32) -> (i32, i32) {
    %c0_i32 = arith.constant 0 : i32
    %c0_i32_0 = arith.constant 0 : i32
    %c0_i32_1 = arith.constant 0 : i32
    return %c0_i32, %c0_i32_0 : i32, i32
  }
  func.func @transform_7(%arg0: i32) -> (i32, i32) {
    %c0_i32 = arith.constant 0 : i32
    %c0_i32_0 = arith.constant 0 : i32
    return %c0_i32, %arg0 : i32, i32
  }
  func.func @transform_8(%arg0: i32) -> (i32, i32) {
    %c0_i32 = arith.constant 0 : i32
    %c0_i32_0 = arith.constant 0 : i32
    return %c0_i32, %arg0 : i32, i32
  }
}

</mosaic_0001>

<llo_original>
// kernel: curriculum_face_forward.2
$region0: #{curriculum_face_forward.2}
  #allocation0 [shape = 'u32[]', space=smem, size = 0x4, offset = 0x4, fixed_abs, tag = 'smem constant byte address 0x4 - core index']
  #allocation1 [shape = 'u32[144,128]{1,0:T(1,128)}', space=vmem, size = 0x12000, scoped, tag = 'internal scratch']
  #allocation2 [shape = 'f32[1,1]{1,0:T(1,128)S(6)}', space=smem, size = 0x200, scoped, tag = 'scoped memory for curriculum_face_forward.2']
  %s0 = inlined_call_operand.vmem [shape: f32[8,32], index: 0, kind: input, shape index: {}]
  %s1 = inlined_call_operand.vmem [shape: f32[8,32], index: 1, kind: input, shape index: {}]
  %s2 = inlined_call_operand.<no memory space> [shape: f32[1,1], index: 2, kind: input, shape index: {}]
  %s3 = inlined_call_operand.vmem [shape: f32[8,32], index: 3, kind: output, shape index: {0}]
  %s4 = inlined_call_operand.vmem [shape: f32[8,1], index: 4, kind: output, shape index: {1}]
  %s5 = inlined_call_operand.vmem [shape: f32[8,1], index: 5, kind: output, shape index: {2}]
  %s6 = inlined_call_operand.hbm [shape: f32[1,1], index: 6, kind: output, shape index: {3}]
  %7 = xla_tuple %s3, %s4, %s5, %s6
  %s8 = sld [smem:[#allocation0]]
  $region46: #{curriculum_face_forward.2} parent=0
    _
  %s10 = ssub.s32 1, %s8
  %s11 = scalar_select 0, %s10, %s8
  %12 = sst [smem:[#allocation2]] %s2
  $region1: #{curriculum_face_forward.2} parent=0
    #allocation3 [shape = 'u8[512]{0}', space=smem, size = 0x200, scoped, tag = 'output window, operand 3, single buffered']
    #allocation4 [shape = 's32[1]{0}', space=sflag, size = 0x4, scoped, tag = 'scoped memory for curriculum_face_forward.2']
    %13 = vsyncpa [#allocation4], 0
    // Predicated region
    $region2: #{curriculum_face_forward.2} parent=1 // pred_check
      _
    $region3: #{curriculum_face_forward.2} parent=1 // pred_check_branch
      %15 = sbr.rel (0) target = $region5
    $region4: #{curriculum_face_forward.2} parent=1 // pred_region
      _
    $region5: #{curriculum_face_forward.2} parent=1 // pred_fallthru
      _
    // Predicated region
    $region6: #{curriculum_face_forward.2} parent=1 // pred_check
      _
    $region7: #{curriculum_face_forward.2} parent=1 // pred_check_branch
      %17 = sbr.rel (0) target = $region9
    $region8: #{curriculum_face_forward.2} parent=1 // pred_region
      _
    $region9: #{curriculum_face_forward.2} parent=1 // pred_fallthru
      _
    // Predicated region
    $region10: #{curriculum_face_forward.2} parent=1 // pred_check
      _
    $region11: #{curriculum_face_forward.2} parent=1 // pred_check_branch
      %19 = sbr.rel (0) target = $region13
    $region12: #{curriculum_face_forward.2} parent=1 // pred_region
      _
    $region13: #{curriculum_face_forward.2} parent=1 // pred_fallthru
      _
    %v20 = vld [vmem:[%s0] sm:$0xff]
    %v21 = vld [vmem:[%s1] sm:$0xff]
    %s22 = sld [smem:[#allocation2]]
    %v23 = vmul.f32 %v20, %v20
    %vm24 = vcmask 261120
    %v25 = vsel %vm24, %v23, 0.0
    %26 = vadd.xlane.f32.xlu0 %v25
    %v27 = vpop.xlane.xlu0 %26
    %v28 = vrsqrt.pop %v27
    %v29 = vmul.f32 %v20, %v28
    %v30 = vmul.f32 %v21, %v21
    %v31 = vsel %vm24, %v30, 0.0
    %32 = vadd.xlane.f32.xlu0 %v31
    %v33 = vpop.xlane.xlu0 %32
    %v34 = vrsqrt.pop %v33
    %v35 = vmul.f32 %v21, %v34
    %v36 = vmul.f32 %v29, %v35
    %v37 = vsel %vm24, %v36, 0.0
    %38 = vadd.xlane.f32.xlu0 %v37
    %v39 = vpop.xlane.xlu0 %38
    %v40 = vmax.f32 %v39, -1.0
    %v41 = vmin.f32 %v40, 1.0
    %v42 = vmul.f32 %v41, %v41
    %v43 = vsub.f32 1.0, %v42
    %v44 = vrsqrt.pop %v43
    %v45 = vmul.f32 %v43, %v44
    %vm46 = vcmp.eq.f32.partialorder %v43, inf
    %v47 = vsel %vm46, %v43, %v45
    %vm48 = vcmp.eq.f32.partialorder %v43, 0.0
    %v49 = vand.u32 %v43, 2147483648
    %v50 = vsel %vm48, %v49, %v47
    %v51 = vmul.f32 %v41, 0.87758255
    %v52 = vmul.f32 %v50, 0.47942555
    %v53 = vsub.f32 %v51, %v52
    %vm54 = vcmp.gt.f32.partialorder %v41, -0.87758255
    %v55 = vsub.f32 %v41, 0.23971277
    %v56 = vsel %vm54, %v53, %v55
    %vm57 = vcmask 7168
    %v58 = vsel %vm57, %v41, 0.0
    %59 = vadd.xlane.f32.xlu0 %v58
    %v60 = vpop.xlane.xlu0 %59
    %v61 = vrot.slane %v60, 4
    %v62 = vadd.f32 %v60, %v61
    %v63 = vrot.slane %v62, 2
    %v64 = vadd.f32 %v62, %v63
    %v65 = vrot.slane %v64, 1
    %v66 = vadd.f32 %v64, %v65
    %s67 = vtos %v66
    %v68 = vrcp.pop 8.0
    %s69 = vtos %v68
    %s70 = smul.f32 %s67, %s69
    %s71 = smul.f32 %s70, 0.01
    %s72 = smul.f32 %s22, 0.99
    %s73 = sadd.f32 %s71, %s72
    %74 = vst.msk [vmem:[%s3] sm:$0xff] %vm24, %v29
    %75 = vst.msk [vmem:[%s4] sm:$0xff] %vm57, %v53
    %76 = vst.msk [vmem:[%s5] sm:$0xff] %vm57, %v56
    %s77 = scalar_lea.smem [#allocation3], 0
    %78 = sst [smem:[%s77]] %s73
    // Predicated region
    $region14: #{curriculum_face_forward.2} parent=1 // pred_check
      _
    $region15: #{curriculum_face_forward.2} parent=1 // pred_check_branch
      %80 = sbr.rel (0) target = $region17
    $region16: #{curriculum_face_forward.2} parent=1 // pred_region
      _
    $region17: #{curriculum_face_forward.2} parent=1 // pred_fallthru
      _
    // Predicated region
    $region18: #{curriculum_face_forward.2} parent=1 // pred_check
      _
    $region19: #{curriculum_face_forward.2} parent=1 // pred_check_branch
      %82 = sbr.rel (0) target = $region21
    $region20: #{curriculum_face_forward.2} parent=1 // pred_region
      _
    $region21: #{curriculum_face_forward.2} parent=1 // pred_fallthru
      _
    // Predicated region
    $region22: #{curriculum_face_forward.2} parent=1 // pred_check
      _
    $region23: #{curriculum_face_forward.2} parent=1 // pred_check_branch
      %84 = sbr.rel (0) target = $region25
    $region24: #{curriculum_face_forward.2} parent=1 // pred_region
      _
    $region25: #{curriculum_face_forward.2} parent=1 // pred_fallthru
      _
    // Predicated region
    $region26: #{curriculum_face_forward.2} parent=1 // pred_check
      _
    $region27: #{curriculum_face_forward.2} parent=1 // pred_check_branch
      %86 = sbr.rel (0) target = $region29
    $region28: #{curriculum_face_forward.2} parent=1 // pred_region
      %s88 = ssub.s32 16, 16
      %89 = vsyncadd [#allocation4], %s88
      %92 = dma.smem_to_hbm [#allocation3], 16, %s6, [#allocation4]
    $region29: #{curriculum_face_forward.2} parent=1 // pred_fallthru
      _
    // Predicated region
    $region30: #{curriculum_face_forward.2} parent=1 // pred_check
      _
    $region31: #{curriculum_face_forward.2} parent=1 // pred_check_branch
      %94 = sbr.rel (0) target = $region33
    $region32: #{curriculum_face_forward.2} parent=1 // pred_region
      _
    $region33: #{curriculum_face_forward.2} parent=1 // pred_fallthru
      _
    // Predicated region
    $region34: #{curriculum_face_forward.2} parent=1 // pred_check
      _
    $region35: #{curriculum_face_forward.2} parent=1 // pred_check_branch
      %96 = sbr.rel (0) target = $region37
    $region36: #{curriculum_face_forward.2} parent=1 // pred_region
      _
    $region37: #{curriculum_face_forward.2} parent=1 // pred_fallthru
      _
    // Predicated region
    $region38: #{curriculum_face_forward.2} parent=1 // pred_check
      _
    $region39: #{curriculum_face_forward.2} parent=1 // pred_check_branch
      %98 = sbr.rel (0) target = $region41
    $region40: #{curriculum_face_forward.2} parent=1 // pred_region
      _
    $region41: #{curriculum_face_forward.2} parent=1 // pred_fallthru
      _
    // Predicated region
    $region42: #{curriculum_face_forward.2} parent=1 // pred_check
      _
    $region43: #{curriculum_face_forward.2} parent=1 // pred_check_branch
      %100 = sbr.rel (0) target = $region45
    $region44: #{curriculum_face_forward.2} parent=1 // pred_region
      %101 = dma.done [#allocation4], 16
    $region45: #{curriculum_face_forward.2} parent=1 // pred_fallthru
      _
    %102 = sfence
    %103 = vsyncpa [#allocation4], 1

// kernel: curriculum_face_forward.3
$region0: #{curriculum_face_forward.3}
  #allocation0 [shape = 'u32[]', space=smem, size = 0x4, offset = 0x4, fixed_abs, tag = 'smem constant byte address 0x4 - core index']
  #allocation1 [shape = 'u32[144,128]{1,0:T(1,128)}', space=vmem, size = 0x12000, scoped, tag = 'internal scratch']
  #allocation2 [shape = 'f32[1,1]{1,0:T(1,128)S(6)}', space=smem, size = 0x200, scoped, tag = 'scoped memory for curriculum_face_forward.3']
  %s0 = inlined_call_operand.vmem [shape: f32[8,32], index: 0, kind: input, shape index: {}]
  %s1 = inlined_call_operand.vmem [shape: f32[32,128], index: 1, kind: input, shape index: {}]
  %s2 = inlined_call_operand.vmem [shape: f32[1,128], index: 2, kind: input, shape index: {}]
  %s3 = inlined_call_operand.vmem [shape: f32[8,1], index: 3, kind: input, shape index: {}]
  %s4 = inlined_call_operand.vmem [shape: f32[8,1], index: 4, kind: input, shape index: {}]
  %s5 = inlined_call_operand.vmem [shape: s32[8,1], index: 5, kind: input, shape index: {}]
  %s6 = inlined_call_operand.<no memory space> [shape: f32[1,1], index: 6, kind: input, shape index: {}]
  %s7 = inlined_call_operand.hbm [shape: f32[8,128], index: 7, kind: output, shape index: {0}]
  %s8 = inlined_call_operand.hbm [shape: f32[8,128], index: 8, kind: output, shape index: {1}]
  %9 = xla_tuple %s7, %s8
  %s10 = sld [smem:[#allocation0]]
  $region46: #{curriculum_face_forward.3} parent=0
    _
  %s12 = ssub.s32 1, %s10
  %s13 = scalar_select 0, %s12, %s10
  %14 = sst [smem:[#allocation2]] %s6
  $region1: #{curriculum_face_forward.3} parent=0
    #allocation3 [shape = 'u8[4096]{0}', space=vmem, size = 0x1000, scoped, tag = 'output window, operand 0, single buffered']
    #allocation4 [shape = 's32[1]{0}', space=sflag, size = 0x4, scoped, tag = 'scoped memory for curriculum_face_forward.3']
    #allocation5 [shape = 'u8[4096]{0}', space=vmem, size = 0x1000, scoped, tag = 'output window, operand 1, single buffered']
    #allocation6 [shape = 's32[1]{0}', space=sflag, size = 0x4, scoped, tag = 'scoped memory for curriculum_face_forward.3']
    %15 = vsyncpa [#allocation4], 0
    %16 = vsyncpa [#allocation6], 0
    // Predicated region
    $region2: #{curriculum_face_forward.3} parent=1 // pred_check
      _
    $region3: #{curriculum_face_forward.3} parent=1 // pred_check_branch
      %18 = sbr.rel (0) target = $region5
    $region4: #{curriculum_face_forward.3} parent=1 // pred_region
      _
    $region5: #{curriculum_face_forward.3} parent=1 // pred_fallthru
      _
    // Predicated region
    $region6: #{curriculum_face_forward.3} parent=1 // pred_check
      _
    $region7: #{curriculum_face_forward.3} parent=1 // pred_check_branch
      %20 = sbr.rel (0) target = $region9
    $region8: #{curriculum_face_forward.3} parent=1 // pred_region
      _
    $region9: #{curriculum_face_forward.3} parent=1 // pred_fallthru
      _
    // Predicated region
    $region10: #{curriculum_face_forward.3} parent=1 // pred_check
      _
    $region11: #{curriculum_face_forward.3} parent=1 // pred_check_branch
      %22 = sbr.rel (0) target = $region13
    $region12: #{curriculum_face_forward.3} parent=1 // pred_region
      _
    $region13: #{curriculum_face_forward.3} parent=1 // pred_fallthru
      _
    // Predicated region
    $region14: #{curriculum_face_forward.3} parent=1 // pred_check
      _
    $region15: #{curriculum_face_forward.3} parent=1 // pred_check_branch
      %24 = sbr.rel (0) target = $region17
    $region16: #{curriculum_face_forward.3} parent=1 // pred_region
      _
    $region17: #{curriculum_face_forward.3} parent=1 // pred_fallthru
      _
    // Predicated region
    $region18: #{curriculum_face_forward.3} parent=1 // pred_check
      _
    $region19: #{curriculum_face_forward.3} parent=1 // pred_check_branch
      %26 = sbr.rel (0) target = $region21
    $region20: #{curriculum_face_forward.3} parent=1 // pred_region
      _
    $region21: #{curriculum_face_forward.3} parent=1 // pred_fallthru
      _
    // Predicated region
    $region22: #{curriculum_face_forward.3} parent=1 // pred_check
      _
    $region23: #{curriculum_face_forward.3} parent=1 // pred_check_branch
      %28 = sbr.rel (0) target = $region25
    $region24: #{curriculum_face_forward.3} parent=1 // pred_region
      _
    $region25: #{curriculum_face_forward.3} parent=1 // pred_fallthru
      _
    // Predicated region
    $region26: #{curriculum_face_forward.3} parent=1 // pred_check
      _
    $region27: #{curriculum_face_forward.3} parent=1 // pred_check_branch
      %30 = sbr.rel (0) target = $region29
    $region28: #{curriculum_face_forward.3} parent=1 // pred_region
      _
    $region29: #{curriculum_face_forward.3} parent=1 // pred_fallthru
      _
    %v31 = vld [vmem:[%s0] sm:$0xff]
    %v32 = vld [vmem:[%s1] sm:$0xff]
    %v33 = vld [vmem:[%s1 + $0x8] sm:$0xff]
    %v34 = vld [vmem:[%s1 + $0x10] sm:$0xff]
    %v35 = vld [vmem:[%s1 + $0x18] sm:$0xff]
    %v36 = vld [vmem:[%s2] sm:$0x1]
    %v37 = vld [vmem:[%s3] sm:$0xff]
    %v38 = vld [vmem:[%s4] sm:$0xff]
    %v39 = vld [vmem:[%s5] sm:$0xff]
    %s40 = sld [smem:[#allocation2]]
    %vm41 = vcmask 261120
    %v43 = vsel %vm41, %v31, 0
    %45 = vmatprep.subr.mxu0 0.0
    %46 = vmatpush1.msra.mxu0 %v32
    %47 = vmatprep.subr.mxu0 0.0
    %48 = vmatpush1.msra.mxu0 %v33
    %49 = vmatprep.subr.mxu0 0.0
    %50 = vmatpush1.msra.mxu0 %v34
    %51 = vmatprep.subr.mxu0 0.0
    %52 = vmatpush1.msra.mxu0 %v35
    %53 = vmatprep.subr.mxu0 0.0
    %54 = vmatpush1.msra.mxu0 0.0
    %55 = vmatprep.subr.mxu0 0.0
    %56 = vmatpush1.msra.mxu0 0.0
    %57 = vmatprep.subr.mxu0 0.0
    %58 = vmatpush1.msra.mxu0 0.0
    %59 = vmatprep.subr.mxu0 0.0
    %60 = vmatpush1.msra.mxu0 0.0
    %61 = vmatprep.subr.mxu0 0.0
    %62 = vmatpush1.msra.mxu0 0.0
    %63 = vmatprep.subr.mxu0 0.0
    %64 = vmatpush1.msra.mxu0 0.0
    %65 = vmatprep.subr.mxu0 0.0
    %66 = vmatpush1.msra.mxu0 0.0
    %67 = vmatprep.subr.mxu0 0.0
    %68 = vmatpush1.msra.mxu0 0.0
    %69 = vmatprep.subr.mxu0 0.0
    %70 = vmatpush1.msra.mxu0 0.0
    %71 = vmatprep.subr.mxu0 0.0
    %72 = vmatpush1.msra.mxu0 0.0
    %73 = vmatprep.subr.mxu0 0.0
    %74 = vmatpush1.msra.mxu0 0.0
    %75 = vmatprep.subr.mxu0 0.0
    %76 = vmatpush1.msra.mxu0 0.0
    %77 = vmatprep.subr.mxu0 0.0
    %78 = vmatpush1.msra.mxu0 0.0
    %79 = vmatprep.subr.mxu0 0.0
    %80 = vmatpush1.msra.mxu0 0.0
    %81 = vmatprep.subr.mxu0 0.0
    %82 = vmatpush1.msra.mxu0 0.0
    %83 = vmatprep.subr.mxu0 0.0
    %84 = vmatpush1.msra.mxu0 0.0
    %85 = vmatprep.subr.mxu0 0.0
    %86 = vmatpush1.msra.mxu0 0.0
    %87 = vmatprep.subr.mxu0 0.0
    %88 = vmatpush1.msra.mxu0 0.0
    %89 = vmatprep.subr.mxu0 0.0
    %90 = vmatpush1.msra.mxu0 0.0
    %91 = vmatprep.subr.mxu0 0.0
    %92 = vmatpush1.msra.mxu0 0.0
    %93 = vmatprep.subr.mxu0 0.0
    %94 = vmatpush1.msra.mxu0 0.0
    %95 = vmatprep.subr.mxu0 0.0
    %96 = vmatpush1.msra.mxu0 0.0
    %97 = vmatprep.subr.mxu0 0.0
    %98 = vmatpush1.msra.mxu0 0.0
    %99 = vmatprep.subr.mxu0 0.0
    %100 = vmatpush1.msra.mxu0 0.0
    %101 = vmatprep.subr.mxu0 0.0
    %102 = vmatpush1.msra.mxu0 0.0
    %103 = vmatprep.subr.mxu0 0.0
    %104 = vmatpush1.msra.mxu0 0.0
    %105 = vmatprep.subr.mxu0 0.0
    %106 = vmatpush1.msra.mxu0 0.0
    %107 = vmatprep.subr.mxu0 0.0
    %108 = vmatpush1.msra.mxu0 0.0
    %109 = vmatprep.mubr.f32.mxu0 0.0
    %110 = vmatmul.mubr.f32.gmra.mrb[0].mxu0 %v43
    %v111 = vpop.f32.mrb[0].mxu0
    %v112 = vadd.f32 0.0, %v111
    %v113 = vpop.f32.mrb[0].mxu0
    %114 = vdwg.mxu0
    %v116 = vlaneseq
    %v117 = vshrl.u32 %v116, 7
    %v118 = vsub.s32 0, %v117
    %v119 = vrot.slane %v36, %v118
    %v121 = vmul.f32 %v112, %v119
    %v122 = vmax.f32 %v121, -1.0
    %v123 = vmin.f32 %v122, 1.0
    %s124 = smul.u32 0, 128
    %v125 = vlaneseq
    %v126 = vand.u32 %v125, 127
    %v127 = vstv %s124
    %v128 = vadd.s32 %v127, %v126
    %129 = vset.pattern.permute.xlu0 0
    %130 = vperm.xlu0 %129, %v39
    %v131 = vpop.permute.xlu0 %130
    %vm132 = vcmp.eq.s32.totalorder %v128, %v131
    %134 = vset.pattern.permute.xlu0 0
    %135 = vperm.xlu0 %134, %v37
    %v136 = vpop.permute.xlu0 %135
    %vm138 = vcmp.gt.f32.partialorder %v123, %v136
    %v139 = vstv %s40
    %v140 = vadd.f32 %v139, %v123
    %v141 = vmul.f32 %v123, %v140
    %v142 = vsel %vm138, %v141, %v123
    %144 = vset.pattern.permute.xlu0 0
    %145 = vperm.xlu0 %144, %v38
    %v146 = vpop.permute.xlu0 %145
    %v148 = vsel %vm132, %v146, %v142
    %v149 = vmul.f32 %v148, 64.0
    %150 = vst [vmem:[#allocation3] sm:$0xff] %v149
    %v151 = vmul.f32 %v123, 64.0
    %152 = vst [vmem:[#allocation5] sm:$0xff] %v151
    // Predicated region
    $region30: #{curriculum_face_forward.3} parent=1 // pred_check
      _
    $region31: #{curriculum_face_forward.3} parent=1 // pred_check_branch
      %154 = sbr.rel (0) target = $region33
    $region32: #{curriculum_face_forward.3} parent=1 // pred_region
      %s156 = ssub.s32 128, 128
      %157 = vsyncadd [#allocation4], %s156
      %s159 = sshll.u32 [#allocation3], 4
      %s160 = int_to_ptr.vmem [resolvable:$true] %s159
      %162 = dma.vmem_to_hbm [thread:$0]  %s160, 128, %s7, [#allocation4]
    $region33: #{curriculum_face_forward.3} parent=1 // pred_fallthru
      _
    // Predicated region
    $region34: #{curriculum_face_forward.3} parent=1 // pred_check
      _
    $region35: #{curriculum_face_forward.3} parent=1 // pred_check_branch
      %164 = sbr.rel (0) target = $region37
    $region36: #{curriculum_face_forward.3} parent=1 // pred_region
      %s166 = ssub.s32 128, 128
      %167 = vsyncadd [#allocation6], %s166
      %s169 = sshll.u32 [#allocation5], 4
      %s170 = int_to_ptr.vmem [resolvable:$true] %s169
      %172 = dma.vmem_to_hbm [thread:$0]  %s170, 128, %s8, [#allocation6]
    $region37: #{curriculum_face_forward.3} parent=1 // pred_fallthru
      _
    // Predicated region
    $region38: #{curriculum_face_forward.3} parent=1 // pred_check
      _
    $region39: #{curriculum_face_forward.3} parent=1 // pred_check_branch
      %174 = sbr.rel (0) target = $region41
    $region40: #{curriculum_face_forward.3} parent=1 // pred_region
      %175 = dma.done [#allocation4], 128
    $region41: #{curriculum_face_forward.3} parent=1 // pred_fallthru
      _
    // Predicated region
    $region42: #{curriculum_face_forward.3} parent=1 // pred_check
      _
    $region43: #{curriculum_face_forward.3} parent=1 // pred_check_branch
      %177 = sbr.rel (0) target = $region45
    $region44: #{curriculum_face_forward.3} parent=1 // pred_region
      %178 = dma.done [#allocation6], 128
    $region45: #{curriculum_face_forward.3} parent=1 // pred_fallthru
      _
    %179 = vsyncpa [#allocation4], 1
    %180 = vsyncpa [#allocation6], 1

</llo_original>
